<compile_context>
chip_gen: v6e
topology: v6e:2x2x1
jax: 0.10.0
libtpu: 0.0.40
codegen_flags: <defaults>
</compile_context>

<pallas_src>
import functools

import jax
import jax.numpy as jnp
from jax import lax
from jax.experimental import pallas as pl
from jax.experimental.pallas import tpu as pltpu


def _round_up(x: int, m: int) -> int:
    return ((x + m - 1) // m) * m


def _cdiv(a: int, b: int) -> int:
    return (a + b - 1) // b


def mlp_kernel(x_ref, w1_ref, b1_ref, w2_ref, b2_ref, w3_ref, b3_ref, o_ref,
               *, chunk: int, n_chunks: int):
    """3-layer FFN on one batch tile.

    x is read in f32 and cast to bf16 in-kernel (VPU, hidden under MXU/DMA);
    weights are resident bf16; accumulation, bias-add and ReLU are f32; the
    final result is cast to bf16 at the store to halve output HBM writeback.
    The batch tile is processed in `n_chunks` row sub-chunks to overlap MXU
    fill/drain and bound f32 vreg pressure."""
    w1 = w1_ref[...]
    w2 = w2_ref[...]
    w3 = w3_ref[...]
    h1 = w1.shape[1]
    h2 = w2.shape[1]
    n_out = w3.shape[1]

    # Hoist the bias broadcasts out of the (unrolled) chunk loop.
    b1 = jnp.broadcast_to(b1_ref[...], (chunk, h1))
    b2 = jnp.broadcast_to(b2_ref[...], (chunk, h2))
    b3 = jnp.broadcast_to(b3_ref[...], (chunk, n_out))

    def run_chunk(r0):
        # fused f32 -> bf16 cast of the input chunk (MXU fast path)
        x = x_ref[pl.ds(r0, chunk), :].astype(jnp.bfloat16)
        # fc[0]: n_input_fc -> n_hiddens[0], ReLU  (dropout = identity in eval)
        h = jnp.dot(x, w1, preferred_element_type=jnp.float32) + b1
        h = jnp.maximum(h, 0.0)
        # fc[1]: n_hiddens[0] -> n_hiddens[1], ReLU
        h = jnp.dot(h.astype(w2.dtype), w2, preferred_element_type=jnp.float32) + b2
        h = jnp.maximum(h, 0.0)
        # fc_final: n_hiddens[1] -> n_output (padded to a lane-dense 128 cols)
        y = jnp.dot(h.astype(w3.dtype), w3, preferred_element_type=jnp.float32) + b3
        # bf16 store: halves the dominant output HBM stream and vst count
        o_ref[pl.ds(r0, chunk), :] = y.astype(o_ref.dtype)

    if n_chunks == 1:
        run_chunk(0)
    else:
        def body(c, carry):
            run_chunk(pl.multiple_of(c * chunk, chunk))
            return carry
        lax.fori_loop(0, n_chunks, body, 0, unroll=True)


@functools.partial(jax.jit, static_argnames=("block_b", "chunk"))
def ffn_forward(x, w1, b1, w2, b2, w3, b3, *, block_b=2048, chunk=256):
    """y = fc_final(relu(fc1(relu(fc0(x)))))  with weights stored as (in, out)."""
    B, n_in = x.shape
    h1 = w1.shape[1]
    h2 = w2.shape[1]
    n_out = w3.shape[1]

    # Accept (n,) or (1, n) biases; kernel wants (1, n) f32.
    b1 = jnp.reshape(b1, (1, h1)).astype(jnp.float32)
    b2 = jnp.reshape(b2, (1, h2)).astype(jnp.float32)
    b3 = jnp.reshape(b3, (1, n_out)).astype(jnp.float32)

    # ---- lane-dense output: pad the final layer to exactly 128 columns ----
    n_out_pad = _round_up(max(n_out, 128), 128)
    if n_out_pad != n_out:
        w3 = jnp.pad(w3, ((0, 0), (0, n_out_pad - n_out)))
        b3 = jnp.pad(b3, ((0, 0), (0, n_out_pad - n_out)))

    # ---- batch tiling ----
    chunk = max(8, _round_up(int(chunk), 8))
    b_ceil = _round_up(B, chunk)                       # minimal padded batch
    block_b = _round_up(max(chunk, min(int(block_b), b_ceil)), chunk)
    if b_ceil >= 2 * chunk:
        # v7x: keep >= 2 grid steps so ("parallel",) shards across both TCs.
        block_b = min(block_b, _round_up(_cdiv(b_ceil, 2), chunk))
    n_chunks = block_b // chunk

    B_pad = _round_up(B, block_b)
    if B_pad != B:
        # Padded rows compute bias-propagated garbage; they are sliced off below.
        x = jnp.pad(x, ((0, B_pad - B), (0, 0)))
    grid = (B_pad // block_b,)

    # ---- bf16 weights for the MXU fast path; x stays f32 (in-kernel cast) ----
    x = x.astype(jnp.float32)
    w1b = w1.astype(jnp.bfloat16)
    w2b = w2.astype(jnp.bfloat16)
    w3b = w3.astype(jnp.bfloat16)

    # ---- VMEM budget (double-buffered tiles + resident weights), <= 32 MiB ----
    vmem_need = 2 * block_b * n_in * 4                      # x tile, f32, 2 bufs
    vmem_need += 2 * block_b * n_out_pad * 2                # out tile, bf16, 2 bufs
    vmem_need += 2 * (w1b.size + w2b.size + w3b.size) * 2   # weights (bf16)
    vmem_need += 2 * (b1.size + b2.size + b3.size) * 4      # biases (f32)
    vmem_need += 6 * chunk * max(h1, h2, n_out_pad) * 4     # live f32 intermediates
    vmem_limit = min(32 * 1024 * 1024, max(4 * 1024 * 1024, 2 * vmem_need))

    # ---- advisory cost estimate for the XLA scheduler ----
    flops = 2 * B_pad * (n_in * h1 + h1 * h2 + h2 * n_out_pad)
    bytes_accessed = (B_pad * n_in * 4 + B_pad * n_out_pad * 2
                      + (w1b.size + w2b.size + w3b.size) * 2
                      + (b1.size + b2.size + b3.size) * 4)
    cost = pl.CostEstimate(flops=flops, transcendentals=0,
                           bytes_accessed=bytes_accessed)

    in_specs = [
        pl.BlockSpec((block_b, n_in), lambda i: (i, 0)),    # x tile (batch-tiled)
        pl.BlockSpec(w1b.shape, lambda i: (0, 0)),          # weights: resident
        pl.BlockSpec(b1.shape, lambda i: (0, 0)),
        pl.BlockSpec(w2b.shape, lambda i: (0, 0)),
        pl.BlockSpec(b2.shape, lambda i: (0, 0)),
        pl.BlockSpec(w3b.shape, lambda i: (0, 0)),
        pl.BlockSpec(b3.shape, lambda i: (0, 0)),
    ]
    out_specs = pl.BlockSpec((block_b, n_out_pad), lambda i: (i, 0))

    out_pad = pl.pallas_call(
        functools.partial(mlp_kernel, chunk=chunk, n_chunks=n_chunks),
        out_shape=jax.ShapeDtypeStruct((B_pad, n_out_pad), jnp.bfloat16),
        grid=grid,
        in_specs=in_specs,
        out_specs=out_specs,
        compiler_params=pltpu.CompilerParams(
            dimension_semantics=("parallel",),
            vmem_limit_bytes=vmem_limit,
        ),
        cost_estimate=cost,
    )(x, w1b, b1, w2b, b2, w3b, b3)

    return out_pad[:B, :n_out].astype(jnp.float32)


def init_linear(key, n_in, n_out):
    """Deterministic init mimicking nn.Linear's U(-1/sqrt(n_in), 1/sqrt(n_in)).

    Returns W as (n_in, n_out) (transpose of PyTorch's (out, in)) and b as (1, n_out)."""
    kw, kb = jax.random.split(key)
    bound = 1.0 / jnp.sqrt(jnp.float32(n_in))
    w = jax.random.uniform(kw, (n_in, n_out), jnp.float32, -bound, bound)
    b = jax.random.uniform(kb, (1, n_out), jnp.float32, -bound, bound)
    return w, b


def _ref_forward_f32(x, w1, b1, w2, b2, w3, b3):
    """Pure-f32 reference matching the PyTorch module's forward."""
    h = jnp.maximum(jnp.dot(x, w1) + b1, 0.0)
    h = jnp.maximum(jnp.dot(h, w2) + b2, 0.0)
    return jnp.dot(h, w3) + b3


def _ref_forward_bf16(x, w1, b1, w2, b2, w3, b3):
    """Reference with the same bf16-input / f32-accum precision policy as the kernel."""
    bf = jnp.bfloat16
    h = jnp.dot(x.astype(bf), w1.astype(bf), preferred_element_type=jnp.float32) + b1
    h = jnp.maximum(h, 0.0)
    h = jnp.dot(h.astype(bf), w2.astype(bf), preferred_element_type=jnp.float32) + b2
    h = jnp.maximum(h, 0.0)
    y = jnp.dot(h.astype(bf), w3.astype(bf), preferred_element_type=jnp.float32) + b3
    return y


if __name__ == "__main__":
    # Net(n_input=32, n_output=8) defaults: mode='flatten', n_hiddens=[64, 32],
    # batchnorm=False, activation=relu.  Batch of 300 (not a tile multiple) so
    # padding, the 2-step parallel grid and the unrolled sub-chunk loop all run.
    n_input = 32
    n_hiddens = [64, 32]
    n_output = 8
    batch = 300

    root = jax.random.PRNGKey(0)
    kx, k1, k2, k3 = jax.random.split(root, 4)

    x = jax.random.normal(kx, (batch, n_input), jnp.float32)
    w1, b1 = init_linear(k1, n_input, n_hiddens[0])
    w2, b2 = init_linear(k2, n_hiddens[0], n_hiddens[1])
    w3, b3 = init_linear(k3, n_hiddens[1], n_output)

    out = ffn_forward(x, w1, b1, w2, b2, w3, b3, block_b=256, chunk=128)
    out = jax.block_until_ready(out)
    assert out.shape == (batch, n_output)

    # Tight check vs. the precision-matched (bf16 MXU / f32 accum) reference.
    ref_bf = _ref_forward_bf16(x, w1, b1, w2, b2, w3, b3)
    err_bf = float(jnp.max(jnp.abs(out - ref_bf)))
    assert jnp.allclose(out, ref_bf, atol=1e-2, rtol=2e-2), err_bf

    # Loose check vs. the pure-f32 PyTorch-equivalent forward.
    ref_f32 = _ref_forward_f32(x, w1, b1, w2, b2, w3, b3)
    err_f32 = float(jnp.max(jnp.abs(out - ref_f32)))
    assert jnp.allclose(out, ref_f32, atol=5e-2, rtol=5e-2), err_f32

    # TODO(synk): dropout is a no-op at inference; training-time stochastic
    # dropout (pltpu.prng_*) is intentionally not implemented here.
    print("KERNEL_OK")
</pallas_src>

<mosaic_0001>
module attributes {stable_mosaic.version = 11 : i64} {
  func.func @mlp_kernel(%arg0: i32, %arg1: memref<256x32xf32, #tpu.memory_space<vmem>>, %arg2: memref<32x64xbf16, #tpu.memory_space<vmem>>, %arg3: memref<1x64xf32, #tpu.memory_space<vmem>>, %arg4: memref<64x32xbf16, #tpu.memory_space<vmem>>, %arg5: memref<1x32xf32, #tpu.memory_space<vmem>>, %arg6: memref<32x128xbf16, #tpu.memory_space<vmem>>, %arg7: memref<1x128xf32, #tpu.memory_space<vmem>>, %arg8: memref<256x128xbf16, #tpu.memory_space<vmem>>) attributes {dimension_semantics = [#tpu.dimension_semantics<parallel>], iteration_bounds = array<i64: 2>, scalar_prefetch = 0 : i64, scratch_operands = 0 : i64, tpu.core_type = #tpu.core_type<tc>, window_params = [{transform_indices = @transform_0, window_bounds = array<i64: 256, 32>}, {pipeline_mode = #tpu.pipeline_mode<synchronous>, transform_indices = @transform_1, window_bounds = array<i64: 32, 64>}, {pipeline_mode = #tpu.pipeline_mode<synchronous>, transform_indices = @transform_2, window_bounds = array<i64: 1, 64>}, {pipeline_mode = #tpu.pipeline_mode<synchronous>, transform_indices = @transform_3, window_bounds = array<i64: 64, 32>}, {pipeline_mode = #tpu.pipeline_mode<synchronous>, transform_indices = @transform_4, window_bounds = array<i64: 1, 32>}, {pipeline_mode = #tpu.pipeline_mode<synchronous>, transform_indices = @transform_5, window_bounds = array<i64: 32, 128>}, {pipeline_mode = #tpu.pipeline_mode<synchronous>, transform_indices = @transform_6, window_bounds = array<i64: 1, 128>}, {transform_indices = @transform_7, window_bounds = array<i64: 256, 128>}]} {
    %c0 = arith.constant 0 : index
    %c0_0 = arith.constant 0 : index
    %0 = vector.load %arg2[%c0, %c0_0] : memref<32x64xbf16, #tpu.memory_space<vmem>>, vector<32x64xbf16>
    %c0_1 = arith.constant 0 : index
    %c0_2 = arith.constant 0 : index
    %1 = vector.load %arg4[%c0_1, %c0_2] : memref<64x32xbf16, #tpu.memory_space<vmem>>, vector<64x32xbf16>
    %c0_3 = arith.constant 0 : index
    %c0_4 = arith.constant 0 : index
    %2 = vector.load %arg6[%c0_3, %c0_4] : memref<32x128xbf16, #tpu.memory_space<vmem>>, vector<32x128xbf16>
    %c0_5 = arith.constant 0 : index
    %c0_6 = arith.constant 0 : index
    %3 = vector.load %arg3[%c0_5, %c0_6] : memref<1x64xf32, #tpu.memory_space<vmem>>, vector<1x64xf32>
    %4 = vector.shape_cast %3 : vector<1x64xf32> to vector<1x64xf32>
    %5 = vector.broadcast %4 : vector<1x64xf32> to vector<128x64xf32>
    %c0_7 = arith.constant 0 : index
    %c0_8 = arith.constant 0 : index
    %6 = vector.load %arg5[%c0_7, %c0_8] : memref<1x32xf32, #tpu.memory_space<vmem>>, vector<1x32xf32>
    %7 = vector.shape_cast %6 : vector<1x32xf32> to vector<1x32xf32>
    %8 = vector.broadcast %7 : vector<1x32xf32> to vector<128x32xf32>
    %c0_9 = arith.constant 0 : index
    %c0_10 = arith.constant 0 : index
    %9 = vector.load %arg7[%c0_9, %c0_10] : memref<1x128xf32, #tpu.memory_space<vmem>>, vector<1x128xf32>
    %10 = vector.shape_cast %9 : vector<1x128xf32> to vector<1x128xf32>
    %11 = vector.broadcast %10 : vector<1x128xf32> to vector<128x128xf32>
    %c0_i32 = arith.constant 0 : i32
    %c128_i32 = arith.constant 128 : i32
    %12 = arith.muli %c0_i32, %c128_i32 : i32
    %13 = tpu.assume_multiple %12, 128 : i32
    %14 = arith.index_cast %13 : i32 to index
    %c0_11 = arith.constant 0 : index
    %15 = vector.load %arg1[%14, %c0_11] : memref<256x32xf32, #tpu.memory_space<vmem>>, vector<128x32xf32>
    %16 = arith.truncf %15 : vector<128x32xf32> to vector<128x32xbf16>
    %cst = arith.constant dense<0.000000e+00> : vector<128x64xf32>
    %17 = tpu.matmul %16, %0, %cst {dimension_numbers = #tpu.dot_dimension_numbers<[1], [0], [0], [1], [0, 0, 1, 1], [], []>} : vector<128x32xbf16>, vector<32x64xbf16>, vector<128x64xf32> -> vector<128x64xf32>
    %18 = arith.addf %17, %5 : vector<128x64xf32>
    %cst_12 = arith.constant 0.000000e+00 : f32
    %19 = vector.broadcast %cst_12 : f32 to vector<128x64xf32>
    %20 = arith.maximumf %18, %19 : vector<128x64xf32>
    %21 = arith.truncf %20 : vector<128x64xf32> to vector<128x64xbf16>
    %cst_13 = arith.constant dense<0.000000e+00> : vector<128x32xf32>
    %22 = tpu.matmul %21, %1, %cst_13 {dimension_numbers = #tpu.dot_dimension_numbers<[1], [0], [0], [1], [0, 0, 1, 1], [], []>} : vector<128x64xbf16>, vector<64x32xbf16>, vector<128x32xf32> -> vector<128x32xf32>
    %23 = arith.addf %22, %8 : vector<128x32xf32>
    %cst_14 = arith.constant 0.000000e+00 : f32
    %24 = vector.broadcast %cst_14 : f32 to vector<128x32xf32>
    %25 = arith.maximumf %23, %24 : vector<128x32xf32>
    %26 = arith.truncf %25 : vector<128x32xf32> to vector<128x32xbf16>
    %cst_15 = arith.constant dense<0.000000e+00> : vector<128x128xf32>
    %27 = tpu.matmul %26, %2, %cst_15 {dimension_numbers = #tpu.dot_dimension_numbers<[1], [0], [0], [1], [0, 0, 1, 1], [], []>} : vector<128x32xbf16>, vector<32x128xbf16>, vector<128x128xf32> -> vector<128x128xf32>
    %28 = arith.addf %27, %11 : vector<128x128xf32>
    %29 = arith.truncf %28 : vector<128x128xf32> to vector<128x128xbf16>
    %30 = arith.index_cast %13 : i32 to index
    %c0_16 = arith.constant 0 : index
    %31 = vector.load %arg8[%30, %c0_16] : memref<256x128xbf16, #tpu.memory_space<vmem>>, vector<128x128xbf16>
    tpu.vector_store %arg8[%30, %c0_16], %29 {strides = array<i32>} : memref<256x128xbf16, #tpu.memory_space<vmem>>, vector<128x128xbf16>,
    %c1_i32 = arith.constant 1 : i32
    %c128_i32_17 = arith.constant 128 : i32
    %32 = arith.muli %c1_i32, %c128_i32_17 : i32
    %33 = tpu.assume_multiple %32, 128 : i32
    %34 = arith.index_cast %33 : i32 to index
    %c0_18 = arith.constant 0 : index
    %35 = vector.load %arg1[%34, %c0_18] : memref<256x32xf32, #tpu.memory_space<vmem>>, vector<128x32xf32>
    %36 = arith.truncf %35 : vector<128x32xf32> to vector<128x32xbf16>
    %cst_19 = arith.constant dense<0.000000e+00> : vector<128x64xf32>
    %37 = tpu.matmul %36, %0, %cst_19 {dimension_numbers = #tpu.dot_dimension_numbers<[1], [0], [0], [1], [0, 0, 1, 1], [], []>} : vector<128x32xbf16>, vector<32x64xbf16>, vector<128x64xf32> -> vector<128x64xf32>
    %38 = arith.addf %37, %5 : vector<128x64xf32>
    %cst_20 = arith.constant 0.000000e+00 : f32
    %39 = vector.broadcast %cst_20 : f32 to vector<128x64xf32>
    %40 = arith.maximumf %38, %39 : vector<128x64xf32>
    %41 = arith.truncf %40 : vector<128x64xf32> to vector<128x64xbf16>
    %cst_21 = arith.constant dense<0.000000e+00> : vector<128x32xf32>
    %42 = tpu.matmul %41, %1, %cst_21 {dimension_numbers = #tpu.dot_dimension_numbers<[1], [0], [0], [1], [0, 0, 1, 1], [], []>} : vector<128x64xbf16>, vector<64x32xbf16>, vector<128x32xf32> -> vector<128x32xf32>
    %43 = arith.addf %42, %8 : vector<128x32xf32>
    %cst_22 = arith.constant 0.000000e+00 : f32
    %44 = vector.broadcast %cst_22 : f32 to vector<128x32xf32>
    %45 = arith.maximumf %43, %44 : vector<128x32xf32>
    %46 = arith.truncf %45 : vector<128x32xf32> to vector<128x32xbf16>
    %cst_23 = arith.constant dense<0.000000e+00> : vector<128x128xf32>
    %47 = tpu.matmul %46, %2, %cst_23 {dimension_numbers = #tpu.dot_dimension_numbers<[1], [0], [0], [1], [0, 0, 1, 1], [], []>} : vector<128x32xbf16>, vector<32x128xbf16>, vector<128x128xf32> -> vector<128x128xf32>
    %48 = arith.addf %47, %11 : vector<128x128xf32>
    %49 = arith.truncf %48 : vector<128x128xf32> to vector<128x128xbf16>
    %50 = arith.index_cast %33 : i32 to index
    %c0_24 = arith.constant 0 : index
    %51 = vector.load %arg8[%50, %c0_24] : memref<256x128xbf16, #tpu.memory_space<vmem>>, vector<128x128xbf16>
    tpu.vector_store %arg8[%50, %c0_24], %49 {strides = array<i32>} : memref<256x128xbf16, #tpu.memory_space<vmem>>, vector<128x128xbf16>,
    %c2_i32 = arith.constant 2 : i32
    return
  }
  func.func @transform_0(%arg0: i32) -> (i32, i32) {
    %c0_i32 = arith.constant 0 : i32
    %c0_i32_0 = arith.constant 0 : i32
    return %arg0, %c0_i32 : i32, i32
  }
  func.func @transform_1(%arg0: i32) -> (i32, i32) {
    %c0_i32 = arith.constant 0 : i32
    %c0_i32_0 = arith.constant 0 : i32
    %c0_i32_1 = arith.constant 0 : i32
    return %c0_i32, %c0_i32_0 : i32, i32
  }
  func.func @transform_2(%arg0: i32) -> (i32, i32) {
    %c0_i32 = arith.constant 0 : i32
    %c0_i32_0 = arith.constant 0 : i32
    %c0_i32_1 = arith.constant 0 : i32
    return %c0_i32, %c0_i32_0 : i32, i32
  }
  func.func @transform_3(%arg0: i32) -> (i32, i32) {
    %c0_i32 = arith.constant 0 : i32
    %c0_i32_0 = arith.constant 0 : i32
    %c0_i32_1 = arith.constant 0 : i32
    return %c0_i32, %c0_i32_0 : i32, i32
  }
  func.func @transform_4(%arg0: i32) -> (i32, i32) {
    %c0_i32 = arith.constant 0 : i32
    %c0_i32_0 = arith.constant 0 : i32
    %c0_i32_1 = arith.constant 0 : i32
    return %c0_i32, %c0_i32_0 : i32, i32
  }
  func.func @transform_5(%arg0: i32) -> (i32, i32) {
    %c0_i32 = arith.constant 0 : i32
    %c0_i32_0 = arith.constant 0 : i32
    %c0_i32_1 = arith.constant 0 : i32
    return %c0_i32, %c0_i32_0 : i32, i32
  }
  func.func @transform_6(%arg0: i32) -> (i32, i32) {
    %c0_i32 = arith.constant 0 : i32
    %c0_i32_0 = arith.constant 0 : i32
    %c0_i32_1 = arith.constant 0 : i32
    return %c0_i32, %c0_i32_0 : i32, i32
  }
  func.func @transform_7(%arg0: i32) -> (i32, i32) {
    %c0_i32 = arith.constant 0 : i32
    %c0_i32_0 = arith.constant 0 : i32
    return %arg0, %c0_i32 : i32, i32
  }
}

</mosaic_0001>

<llo_original>
// kernel: ffn_forward.1
$region0: #{ffn_forward.1}
  #allocation0 [shape = 'u32[]', space=smem, size = 0x4, offset = 0x4, fixed_abs, tag = 'smem constant byte address 0x4 - core index']
  #allocation1 [shape = 'u32[144,128]{1,0:T(1,128)}', space=vmem, size = 0x12000, scoped, tag = 'internal scratch']
  %s0 = inlined_call_operand.vmem [shape: f32[512,32], index: 0, kind: input, shape index: {}]
  %s1 = inlined_call_operand.vmem [shape: bf16[32,64], index: 1, kind: input, shape index: {}]
  %s2 = inlined_call_operand.vmem [shape: f32[1,64], index: 2, kind: input, shape index: {}]
  %s3 = inlined_call_operand.vmem [shape: bf16[64,32], index: 3, kind: input, shape index: {}]
  %s4 = inlined_call_operand.vmem [shape: f32[1,32], index: 4, kind: input, shape index: {}]
  %s5 = inlined_call_operand.vmem [shape: bf16[32,128], index: 5, kind: input, shape index: {}]
  %s6 = inlined_call_operand.vmem [shape: f32[1,128], index: 6, kind: input, shape index: {}]
  %s7 = inlined_call_operand.vmem [shape: bf16[512,128], index: 7, kind: output, shape index: {}]
  %s8 = sld [smem:[#allocation0]]
  $region61: #{ffn_forward.1} parent=0
    _
  %s10 = ssub.s32 1, %s8
  %s11 = scalar_select 0, %s10, %s8
  loop: start=0, step=1, limit=4
  $region2: #{ffn_forward.1} parent=0 // loop_pre_header
    _
  $region3: #{ffn_forward.1} parent=0 // loop_header
    %s13 = sphi 0, %s17
    %p14 = scmp.ge.s32.totalorder %s13, 4
    %s23 = sphi 0, %s25
    %s26 = sphi 0, %s23
    %s27 = sphi 0, %s26
    %s43 = sphi 0, %s27
    %s47 = sphi 0, %s47
    %s49 = sphi 0, %s47
    %s50 = sphi 0, %s49
    %s64 = sphi 0, %s50
    %s68 = sphi 0, %s68
    %s70 = sphi 0, %s68
    %s71 = sphi 0, %s70
    %s85 = sphi 0, %s71
    %s89 = sphi 0, %s89
    %s91 = sphi 0, %s89
    %s92 = sphi 0, %s91
    %s106 = sphi 0, %s92
    %s110 = sphi 0, %s110
    %s112 = sphi 0, %s110
    %s113 = sphi 0, %s112
    %s127 = sphi 0, %s113
    %s131 = sphi 0, %s131
    %s133 = sphi 0, %s131
    %s134 = sphi 0, %s133
    %s148 = sphi 0, %s134
    %s152 = sphi 0, %s152
    %s154 = sphi 0, %s152
    %s155 = sphi 0, %s154
    %s169 = sphi 0, %s155
    %s175 = sphi 0, %s177
    %s178 = sphi 0, %s175
    %s179 = sphi 0, %s178
    %s195 = sphi 0, %s179
  $region4: #{ffn_forward.1} parent=0 // loop_header_branch
    %16 = sbr.rel (%p14) target = $region8
  $region5: #{ffn_forward.1} parent=0 // loop_body
    %s18 = ssub.s32 %s13, 1
    %s19 = ssub.s32 %s13, 2
    %s20 = sadd.s32 %s13, 1
    %s21 = ssub.s32 %s13, %s20
    %p22 = scmp.eq.s32.totalorder %s21, 0
    %s24 = sadd.s32 %s23, 1
    %s25 = scalar_select %p22, %s23, %s24
    %p28 = pneg %p22
    %p29 = scmp.eq.s32.totalorder %s13, 1
    %p30 = por %p28, %p29
    %p31 = scmp.ne.s32.totalorder %s23, %s26
    %p32 = scmp.eq.s32.totalorder %s13, 0
    %p33 = por %p31, %p32
    %p34 = scmp.ne.s32.totalorder %s23, %s26
    %p35 = scmp.eq.s32.totalorder %s18, 1
    %p36 = por %p34, %p35
    %p37 = scmp.ne.s32.totalorder %s26, %s27
    %p38 = scmp.eq.s32.totalorder %s18, 0
    %p39 = por %p37, %p38
    %p40 = scmp.ne.s32.totalorder %s26, %s27
    %p41 = scmp.eq.s32.totalorder %s19, 1
    %p42 = por %p40, %p41
    %p44 = scmp.ne.s32.totalorder %s27, %s43
    %p45 = scmp.eq.s32.totalorder %s19, 0
    %p46 = por %p44, %p45
    %s48 = sadd.s32 %s47, 1
    %p51 = scmp.eq.s32.totalorder %s13, 1
    %p52 = scmp.ne.s32.totalorder %s47, %s49
    %p53 = scmp.eq.s32.totalorder %s13, 0
    %p54 = por %p52, %p53
    %p55 = scmp.ne.s32.totalorder %s47, %s49
    %p56 = scmp.eq.s32.totalorder %s18, 1
    %p57 = por %p55, %p56
    %p58 = scmp.ne.s32.totalorder %s49, %s50
    %p59 = scmp.eq.s32.totalorder %s18, 0
    %p60 = por %p58, %p59
    %p61 = scmp.ne.s32.totalorder %s49, %s50
    %p62 = scmp.eq.s32.totalorder %s19, 1
    %p63 = por %p61, %p62
    %p65 = scmp.ne.s32.totalorder %s50, %s64
    %p66 = scmp.eq.s32.totalorder %s19, 0
    %p67 = por %p65, %p66
    %s69 = sadd.s32 %s68, 1
    %p72 = scmp.eq.s32.totalorder %s13, 1
    %p73 = scmp.ne.s32.totalorder %s68, %s70
    %p74 = scmp.eq.s32.totalorder %s13, 0
    %p75 = por %p73, %p74
    %p76 = scmp.ne.s32.totalorder %s68, %s70
    %p77 = scmp.eq.s32.totalorder %s18, 1
    %p78 = por %p76, %p77
    %p79 = scmp.ne.s32.totalorder %s70, %s71
    %p80 = scmp.eq.s32.totalorder %s18, 0
    %p81 = por %p79, %p80
    %p82 = scmp.ne.s32.totalorder %s70, %s71
    %p83 = scmp.eq.s32.totalorder %s19, 1
    %p84 = por %p82, %p83
    %p86 = scmp.ne.s32.totalorder %s71, %s85
    %p87 = scmp.eq.s32.totalorder %s19, 0
    %p88 = por %p86, %p87
    %s90 = sadd.s32 %s89, 1
    %p93 = scmp.eq.s32.totalorder %s13, 1
    %p94 = scmp.ne.s32.totalorder %s89, %s91
    %p95 = scmp.eq.s32.totalorder %s13, 0
    %p96 = por %p94, %p95
    %p97 = scmp.ne.s32.totalorder %s89, %s91
    %p98 = scmp.eq.s32.totalorder %s18, 1
    %p99 = por %p97, %p98
    %p100 = scmp.ne.s32.totalorder %s91, %s92
    %p101 = scmp.eq.s32.totalorder %s18, 0
    %p102 = por %p100, %p101
    %p103 = scmp.ne.s32.totalorder %s91, %s92
    %p104 = scmp.eq.s32.totalorder %s19, 1
    %p105 = por %p103, %p104
    %p107 = scmp.ne.s32.totalorder %s92, %s106
    %p108 = scmp.eq.s32.totalorder %s19, 0
    %p109 = por %p107, %p108
    %s111 = sadd.s32 %s110, 1
    %p114 = scmp.eq.s32.totalorder %s13, 1
    %p115 = scmp.ne.s32.totalorder %s110, %s112
    %p116 = scmp.eq.s32.totalorder %s13, 0
    %p117 = por %p115, %p116
    %p118 = scmp.ne.s32.totalorder %s110, %s112
    %p119 = scmp.eq.s32.totalorder %s18, 1
    %p120 = por %p118, %p119
    %p121 = scmp.ne.s32.totalorder %s112, %s113
    %p122 = scmp.eq.s32.totalorder %s18, 0
    %p123 = por %p121, %p122
    %p124 = scmp.ne.s32.totalorder %s112, %s113
    %p125 = scmp.eq.s32.totalorder %s19, 1
    %p126 = por %p124, %p125
    %p128 = scmp.ne.s32.totalorder %s113, %s127
    %p129 = scmp.eq.s32.totalorder %s19, 0
    %p130 = por %p128, %p129
    %s132 = sadd.s32 %s131, 1
    %p135 = scmp.eq.s32.totalorder %s13, 1
    %p136 = scmp.ne.s32.totalorder %s131, %s133
    %p137 = scmp.eq.s32.totalorder %s13, 0
    %p138 = por %p136, %p137
    %p139 = scmp.ne.s32.totalorder %s131, %s133
    %p140 = scmp.eq.s32.totalorder %s18, 1
    %p141 = por %p139, %p140
    %p142 = scmp.ne.s32.totalorder %s133, %s134
    %p143 = scmp.eq.s32.totalorder %s18, 0
    %p144 = por %p142, %p143
    %p145 = scmp.ne.s32.totalorder %s133, %s134
    %p146 = scmp.eq.s32.totalorder %s19, 1
    %p147 = por %p145, %p146
    %p149 = scmp.ne.s32.totalorder %s134, %s148
    %p150 = scmp.eq.s32.totalorder %s19, 0
    %p151 = por %p149, %p150
    %s153 = sadd.s32 %s152, 1
    %p156 = scmp.eq.s32.totalorder %s13, 1
    %p157 = scmp.ne.s32.totalorder %s152, %s154
    %p158 = scmp.eq.s32.totalorder %s13, 0
    %p159 = por %p157, %p158
    %p160 = scmp.ne.s32.totalorder %s152, %s154
    %p161 = scmp.eq.s32.totalorder %s18, 1
    %p162 = por %p160, %p161
    %p163 = scmp.ne.s32.totalorder %s154, %s155
    %p164 = scmp.eq.s32.totalorder %s18, 0
    %p165 = por %p163, %p164
    %p166 = scmp.ne.s32.totalorder %s154, %s155
    %p167 = scmp.eq.s32.totalorder %s19, 1
    %p168 = por %p166, %p167
    %p170 = scmp.ne.s32.totalorder %s155, %s169
    %p171 = scmp.eq.s32.totalorder %s19, 0
    %p172 = por %p170, %p171
    %s173 = ssub.s32 %s13, %s20
    %p174 = scmp.eq.s32.totalorder %s173, 0
    %s176 = sadd.s32 %s175, 1
    %s177 = scalar_select %p174, %s175, %s176
    %p180 = pneg %p174
    %p181 = scmp.eq.s32.totalorder %s13, 1
    %p182 = por %p180, %p181
    %p183 = scmp.ne.s32.totalorder %s175, %s178
    %p184 = scmp.eq.s32.totalorder %s13, 0
    %p185 = por %p183, %p184
    %p186 = scmp.ne.s32.totalorder %s175, %s178
    %p187 = scmp.eq.s32.totalorder %s18, 1
    %p188 = por %p186, %p187
    %p189 = scmp.ne.s32.totalorder %s178, %s179
    %p190 = scmp.eq.s32.totalorder %s18, 0
    %p191 = por %p189, %p190
    %p192 = scmp.ne.s32.totalorder %s178, %s179
    %p193 = scmp.eq.s32.totalorder %s19, 1
    %p194 = por %p192, %p193
    %p196 = scmp.ne.s32.totalorder %s179, %s195
    %p197 = scmp.eq.s32.totalorder %s19, 0
    %p198 = por %p196, %p197
    %p199 = scmp.le.s32.totalorder 1, %s13
    %p200 = scmp.lt.s32.totalorder %s13, 3
    %p201 = pnand %p199, %p200
    %p202 = pneg %p201
    // Predicated region
    $region9: #{ffn_forward.1} parent=5 // pred_check
      _
    $region10: #{ffn_forward.1} parent=5 // pred_check_branch
      %204 = sbr.rel (%p201) target = $region12
    $region11: #{ffn_forward.1} parent=5 // pred_region
      %s205 = ssub.s32 %s13, 1
      // Predicated region
      $region13: #{ffn_forward.1} parent=11 // pred_check
        %p206 = pneg %p60
      $region14: #{ffn_forward.1} parent=11 // pred_check_branch
        %208 = sbr.rel (%p206) target = $region16
      $region15: #{ffn_forward.1} parent=11 // pred_region
        _
      $region16: #{ffn_forward.1} parent=11 // pred_fallthru
        _
      // Predicated region
      $region17: #{ffn_forward.1} parent=11 // pred_check
        %p209 = pneg %p81
      $region18: #{ffn_forward.1} parent=11 // pred_check_branch
        %211 = sbr.rel (%p209) target = $region20
      $region19: #{ffn_forward.1} parent=11 // pred_region
        _
      $region20: #{ffn_forward.1} parent=11 // pred_fallthru
        _
      // Predicated region
      $region21: #{ffn_forward.1} parent=11 // pred_check
        %p212 = pneg %p102
      $region22: #{ffn_forward.1} parent=11 // pred_check_branch
        %214 = sbr.rel (%p212) target = $region24
      $region23: #{ffn_forward.1} parent=11 // pred_region
        _
      $region24: #{ffn_forward.1} parent=11 // pred_fallthru
        _
      // Predicated region
      $region25: #{ffn_forward.1} parent=11 // pred_check
        %p215 = pneg %p123
      $region26: #{ffn_forward.1} parent=11 // pred_check_branch
        %217 = sbr.rel (%p215) target = $region28
      $region27: #{ffn_forward.1} parent=11 // pred_region
        _
      $region28: #{ffn_forward.1} parent=11 // pred_fallthru
        _
      // Predicated region
      $region29: #{ffn_forward.1} parent=11 // pred_check
        %p218 = pneg %p144
      $region30: #{ffn_forward.1} parent=11 // pred_check_branch
        %220 = sbr.rel (%p218) target = $region32
      $region31: #{ffn_forward.1} parent=11 // pred_region
        _
      $region32: #{ffn_forward.1} parent=11 // pred_fallthru
        _
      // Predicated region
      $region33: #{ffn_forward.1} parent=11 // pred_check
        %p221 = pneg %p165
      $region34: #{ffn_forward.1} parent=11 // pred_check_branch
        %223 = sbr.rel (%p221) target = $region36
      $region35: #{ffn_forward.1} parent=11 // pred_region
        _
      $region36: #{ffn_forward.1} parent=11 // pred_fallthru
        _
    $region12: #{ffn_forward.1} parent=5 // pred_fallthru
      _
    %p224 = scmp.lt.s32.totalorder %s13, 2
    // Predicated region
    $region37: #{ffn_forward.1} parent=5 // pred_check
      %p225 = pneg %p224
    $region38: #{ffn_forward.1} parent=5 // pred_check_branch
      %227 = sbr.rel (%p225) target = $region40
    $region39: #{ffn_forward.1} parent=5 // pred_region
      // Predicated region
      $region41: #{ffn_forward.1} parent=39 // pred_check
        %p228 = pneg %p33
      $region42: #{ffn_forward.1} parent=39 // pred_check_branch
        %230 = sbr.rel (%p228) target = $region44
      $region43: #{ffn_forward.1} parent=39 // pred_region
        %s231 = smul.u32 32, %s13
        %p232 = scmp.lt.s32.totalorder %s231, 63
        %s233 = scalar_select %p232, %s231, 63
        %s234 = smul.addr %s233, 8
        %s235 = scalar_lea.vmem %s0, %s234
        %s236 = smul.u32 32, %s13
      $region44: #{ffn_forward.1} parent=39 // pred_fallthru
        _
    $region40: #{ffn_forward.1} parent=5 // pred_fallthru
      _
    %p237 = scmp.le.s32.totalorder 1, %s13
    %p238 = scmp.lt.s32.totalorder %s13, 3
    %p239 = pnand %p237, %p238
    %p240 = pneg %p239
    // Predicated region
    $region45: #{ffn_forward.1} parent=5 // pred_check
      _
    $region46: #{ffn_forward.1} parent=5 // pred_check_branch
      %242 = sbr.rel (%p239) target = $region48
    $region47: #{ffn_forward.1} parent=5 // pred_region
      %s243 = ssub.s32 %s13, 1
      %s244 = smul.u32 32, %s18
      %p245 = scmp.lt.s32.totalorder %s244, 63
      %s246 = scalar_select %p245, %s244, 63
      %s247 = smul.addr %s246, 8
      %s248 = scalar_lea.vmem %s0, %s247
      %p249 = pneg %p39
      %p250 = pneg %p36
      %p251 = pneg %p60
      %p252 = pneg %p57
      %p253 = pneg %p81
      %p254 = pneg %p78
      %p255 = pneg %p102
      %p256 = pneg %p99
      %p257 = pneg %p123
      %p258 = pneg %p120
      %p259 = pneg %p144
      %p260 = pneg %p141
      %p261 = pneg %p165
      %p262 = pneg %p162
      %p263 = pneg %p191
      %p264 = pneg %p188
      %s265 = smul.u32 32, %s18
      %p266 = scmp.lt.s32.totalorder %s265, 63
      %s267 = scalar_select %p266, %s265, 63
      %s268 = smul.addr %s267, 4
      %s269 = scalar_lea.vmem %s7, %s268
      %s270 = smul.u32 32, %s18
      %p271 = scmp.lt.s32.totalorder %s270, 63
      %s272 = scalar_select %p271, %s270, 63
      %s273 = smul.addr %s272, 8
      %s274 = scalar_lea.vmem %s0, %s273
      %s275 = smul.u32 32, %s18
      %s276 = smul.u32 32, %s18
      %p277 = scmp.lt.s32.totalorder %s276, 63
      %s278 = scalar_select %p277, %s276, 63
      %s279 = smul.addr %s278, 4
      %s280 = scalar_lea.vmem %s7, %s279
      %s281 = smul.u32 32, %s18
      %v283 = vld [vmem:[%s1] sm:$0xf]
      %v284 = vld [vmem:[%s1 + $0x4] sm:$0xf]
      %v285 = vld [vmem:[%s1 + $0x8] sm:$0xf]
      %v286 = vld [vmem:[%s1 + $0xc] sm:$0xf]
      %v287 = vld [vmem:[%s3] sm:$0xf]
      %v288 = vld [vmem:[%s3 + $0x4] sm:$0xf]
      %v289 = vld [vmem:[%s3 + $0x8] sm:$0xf]
      %v290 = vld [vmem:[%s3 + $0xc] sm:$0xf]
      %v291 = vld [vmem:[%s3 + $0x10] sm:$0xf]
      %v292 = vld [vmem:[%s3 + $0x14] sm:$0xf]
      %v293 = vld [vmem:[%s3 + $0x18] sm:$0xf]
      %v294 = vld [vmem:[%s3 + $0x1c] sm:$0xf]
      %v295 = vld [vmem:[%s5] sm:$0xf]
      %v296 = vld [vmem:[%s5 + $0x4] sm:$0xf]
      %v297 = vld [vmem:[%s5 + $0x8] sm:$0xf]
      %v298 = vld [vmem:[%s5 + $0xc] sm:$0xf]
      %v299 = vld [vmem:[%s2] sm:$0x1]
      %v301 = vlaneseq
      %v302 = vshrl.u32 %v301, 7
      %v303 = vsub.s32 0, %v302
      %v304 = vrot.slane %v299, %v303
      %v306 = vld [vmem:[%s4] sm:$0x1]
      %v308 = vlaneseq
      %v309 = vshrl.u32 %v308, 7
      %v310 = vsub.s32 0, %v309
      %v311 = vrot.slane %v306, %v310
      %v313 = vld [vmem:[%s6] sm:$0x1]
      %v315 = vlaneseq
      %v316 = vshrl.u32 %v315, 7
      %v317 = vsub.s32 0, %v316
      %v318 = vrot.slane %v313, %v317
      %v320 = vld [vmem:[%s274] sm:$0xff]
      %v321 = vld [vmem:[%s274 + $0x8] sm:$0xff]
      %v322 = vld [vmem:[%s274 + $0x10] sm:$0xff]
      %v323 = vld [vmem:[%s274 + $0x18] sm:$0xff]
      %v324 = vld [vmem:[%s274 + $0x20] sm:$0xff]
      %v325 = vld [vmem:[%s274 + $0x28] sm:$0xff]
      %v326 = vld [vmem:[%s274 + $0x30] sm:$0xff]
      %v327 = vld [vmem:[%s274 + $0x38] sm:$0xff]
      %v328 = vld [vmem:[%s274 + $0x40] sm:$0xff]
      %v329 = vld [vmem:[%s274 + $0x48] sm:$0xff]
      %v330 = vld [vmem:[%s274 + $0x50] sm:$0xff]
      %v331 = vld [vmem:[%s274 + $0x58] sm:$0xff]
      %v332 = vld [vmem:[%s274 + $0x60] sm:$0xff]
      %v333 = vld [vmem:[%s274 + $0x68] sm:$0xff]
      %v334 = vld [vmem:[%s274 + $0x70] sm:$0xff]
      %v335 = vld [vmem:[%s274 + $0x78] sm:$0xff]
      %v336 = vpack.c.bf16 %v321, %v320
      %v337 = vpack.c.bf16 %v323, %v322
      %v338 = vpack.c.bf16 %v325, %v324
      %v339 = vpack.c.bf16 %v327, %v326
      %v340 = vpack.c.bf16 %v329, %v328
      %v341 = vpack.c.bf16 %v331, %v330
      %v342 = vpack.c.bf16 %v333, %v332
      %v343 = vpack.c.bf16 %v335, %v334
      %v348 = vunpack.c.l.b16 %v283
      %v349 = vunpack.c.l.b16 %v284
      %v350 = vunpack.c.l.b16 %v285
      %v351 = vunpack.c.l.b16 %v286
      %v352 = vpack.c.b16 %v349, %v348
      %v353 = vpack.c.b16 %v351, %v350
      %vm356 = vcmask 261120
      %v358 = vsel %vm356, %v336, 0
      %v361 = vsel %vm356, %v337, 0
      %v364 = vsel %vm356, %v338, 0
      %v367 = vsel %vm356, %v339, 0
      %v370 = vsel %vm356, %v340, 0
      %v373 = vsel %vm356, %v341, 0
      %v376 = vsel %vm356, %v342, 0
      %v379 = vsel %vm356, %v343, 0
      %381 = vmatprep.subr.bf16.mxu0 0
      %382 = vmatpush1.bf16.msra.mxu0 0
      %383 = vmatprep.subr.bf16.mxu0 0
      %384 = vmatpush1.bf16.msra.mxu0 0
      %385 = vmatprep.subr.bf16.mxu0 0
      %386 = vmatpush1.bf16.msra.mxu0 0
      %387 = vmatprep.subr.bf16.mxu0 0
      %388 = vmatpush1.bf16.msra.mxu0 0
      %389 = vmatprep.subr.bf16.mxu0 0
      %390 = vmatpush1.bf16.msra.mxu0 0
      %391 = vmatprep.subr.bf16.mxu0 0
      %392 = vmatpush1.bf16.msra.mxu0 0
      %393 = vmatprep.subr.bf16.mxu0 0
      %394 = vmatpush1.bf16.msra.mxu0 %v353
      %395 = vmatprep.subr.bf16.mxu0 0
      %396 = vmatpush1.bf16.msra.mxu0 %v352
      %397 = vmatprep.subr.bf16.mxu0 0
      %398 = vmatpush2.bf16.msra.mxu0 0
      %399 = vmatprep.subr.bf16.mxu0 0
      %400 = vmatpush2.bf16.msra.mxu0 0
      %401 = vmatprep.subr.bf16.mxu0 0
      %402 = vmatpush2.bf16.msra.mxu0 0
      %403 = vmatprep.subr.bf16.mxu0 0
      %404 = vmatpush2.bf16.msra.mxu0 0
      %405 = vmatprep.subr.bf16.mxu0 0
      %406 = vmatpush2.bf16.msra.mxu0 0
      %407 = vmatprep.subr.bf16.mxu0 0
      %408 = vmatpush2.bf16.msra.mxu0 0
      %409 = vmatprep.subr.bf16.mxu0 0
      %410 = vmatpush2.bf16.msra.mxu0 0
      %411 = vmatprep.subr.bf16.mxu0 0
      %412 = vmatpush2.bf16.msra.mxu0 0
      %413 = vmatprep.mubr.bf16.mxu0 0
      %414 = vmatmul.mubr.bf16.gmra.mxu0 %v358
      %v415 = vpop.f32.mrf.mxu0
      %v416 = vadd.f32 %v304, %v415
      %v417 = vpop.f32.mrf.mxu0
      %v418 = vpop.f32.mrf.mxu0
      %v419 = vadd.f32 %v304, %v418
      %v420 = vpop.f32.mrf.mxu0
      %421 = vmatprep.mubr.bf16.mxu0 0
      %422 = vmatmul.mubr.bf16.gmra.mxu0 %v361
      %v423 = vpop.f32.mrf.mxu0
      %v424 = vadd.f32 %v304, %v423
      %v425 = vpop.f32.mrf.mxu0
      %v426 = vpop.f32.mrf.mxu0
      %v427 = vadd.f32 %v304, %v426
      %v428 = vpop.f32.mrf.mxu0
      %429 = vmatprep.mubr.bf16.mxu0 0
      %430 = vmatmul.mubr.bf16.gmra.mxu0 %v364
      %v431 = vpop.f32.mrf.mxu0
      %v432 = vadd.f32 %v304, %v431
      %v433 = vpop.f32.mrf.mxu0
      %v434 = vpop.f32.mrf.mxu0
      %v435 = vadd.f32 %v304, %v434
      %v436 = vpop.f32.mrf.mxu0
      %437 = vmatprep.mubr.bf16.mxu0 0
      %438 = vmatmul.mubr.bf16.gmra.mxu0 %v367
      %v439 = vpop.f32.mrf.mxu0
      %v440 = vadd.f32 %v304, %v439
      %v441 = vpop.f32.mrf.mxu0
      %v442 = vpop.f32.mrf.mxu0
      %v443 = vadd.f32 %v304, %v442
      %v444 = vpop.f32.mrf.mxu0
      %445 = vmatprep.mubr.bf16.mxu0 0
      %446 = vmatmul.mubr.bf16.gmra.mxu0 %v370
      %v447 = vpop.f32.mrf.mxu0
      %v448 = vadd.f32 %v304, %v447
      %v449 = vpop.f32.mrf.mxu0
      %v450 = vpop.f32.mrf.mxu0
      %v451 = vadd.f32 %v304, %v450
      %v452 = vpop.f32.mrf.mxu0
      %453 = vmatprep.mubr.bf16.mxu0 0
      %454 = vmatmul.mubr.bf16.gmra.mxu0 %v373
      %v455 = vpop.f32.mrf.mxu0
      %v456 = vadd.f32 %v304, %v455
      %v457 = vpop.f32.mrf.mxu0
      %v458 = vpop.f32.mrf.mxu0
      %v459 = vadd.f32 %v304, %v458
      %v460 = vpop.f32.mrf.mxu0
      %461 = vmatprep.mubr.bf16.mxu0 0
      %462 = vmatmul.mubr.bf16.gmra.mxu0 %v376
      %v463 = vpop.f32.mrf.mxu0
      %v464 = vadd.f32 %v304, %v463
      %v465 = vpop.f32.mrf.mxu0
      %v466 = vpop.f32.mrf.mxu0
      %v467 = vadd.f32 %v304, %v466
      %v468 = vpop.f32.mrf.mxu0
      %469 = vmatprep.mubr.bf16.mxu0 0
      %470 = vmatmul.mubr.bf16.gmra.mxu0 %v379
      %v471 = vpop.f32.mrf.mxu0
      %v472 = vadd.f32 %v304, %v471
      %v473 = vpop.f32.mrf.mxu0
      %v474 = vpop.f32.mrf.mxu0
      %v475 = vadd.f32 %v304, %v474
      %v476 = vpop.f32.mrf.mxu0
      %477 = vdwg.mxu0
      %v478 = vmax.f32 %v416, 0.0
      %v479 = vmax.f32 %v419, 0.0
      %v480 = vmax.f32 %v424, 0.0
      %v481 = vmax.f32 %v427, 0.0
      %v482 = vmax.f32 %v432, 0.0
      %v483 = vmax.f32 %v435, 0.0
      %v484 = vmax.f32 %v440, 0.0
      %v485 = vmax.f32 %v443, 0.0
      %v486 = vmax.f32 %v448, 0.0
      %v487 = vmax.f32 %v451, 0.0
      %v488 = vmax.f32 %v456, 0.0
      %v489 = vmax.f32 %v459, 0.0
      %v490 = vmax.f32 %v464, 0.0
      %v491 = vmax.f32 %v467, 0.0
      %v492 = vmax.f32 %v472, 0.0
      %v493 = vmax.f32 %v475, 0.0
      %v494 = vpack.c.bf16 %v479, %v478
      %v495 = vpack.c.bf16 %v481, %v480
      %v496 = vpack.c.bf16 %v483, %v482
      %v497 = vpack.c.bf16 %v485, %v484
      %v498 = vpack.c.bf16 %v487, %v486
      %v499 = vpack.c.bf16 %v489, %v488
      %v500 = vpack.c.bf16 %v491, %v490
      %v501 = vpack.c.bf16 %v493, %v492
      %v510 = vunpack.c.l.b16 %v287
      %v511 = vunpack.c.l.b16 %v288
      %v512 = vunpack.c.l.b16 %v289
      %v513 = vunpack.c.l.b16 %v290
      %v514 = vunpack.c.l.b16 %v291
      %v515 = vunpack.c.l.b16 %v292
      %v516 = vunpack.c.l.b16 %v293
      %v517 = vunpack.c.l.b16 %v294
      %v518 = vpack.c.b16 %v511, %v510
      %v519 = vpack.c.b16 %v513, %v512
      %v520 = vpack.c.b16 %v515, %v514
      %v521 = vpack.c.b16 %v517, %v516
      %vm526 = vcmask 523264
      %v528 = vsel %vm526, %v494, 0
      %v531 = vsel %vm526, %v495, 0
      %v534 = vsel %vm526, %v496, 0
      %v537 = vsel %vm526, %v497, 0
      %v540 = vsel %vm526, %v498, 0
      %v543 = vsel %vm526, %v499, 0
      %v546 = vsel %vm526, %v500, 0
      %v549 = vsel %vm526, %v501, 0
      %551 = vmatprep.subr.bf16.mxu0 0
      %552 = vmatpush1.bf16.msra.mxu0 0
      %553 = vmatprep.subr.bf16.mxu0 0
      %554 = vmatpush1.bf16.msra.mxu0 0
      %555 = vmatprep.subr.bf16.mxu0 0
      %556 = vmatpush1.bf16.msra.mxu0 0
      %557 = vmatprep.subr.bf16.mxu0 0
      %558 = vmatpush1.bf16.msra.mxu0 0
      %559 = vmatprep.subr.bf16.mxu0 0
      %560 = vmatpush1.bf16.msra.mxu0 %v521
      %561 = vmatprep.subr.bf16.mxu0 0
      %562 = vmatpush1.bf16.msra.mxu0 %v520
      %563 = vmatprep.subr.bf16.mxu0 0
      %564 = vmatpush1.bf16.msra.mxu0 %v519
      %565 = vmatprep.subr.bf16.mxu0 0
      %566 = vmatpush1.bf16.msra.mxu0 %v518
      %567 = vmatprep.subr.bf16.mxu0 0
      %568 = vmatpush2.bf16.msra.mxu0 0
      %569 = vmatprep.subr.bf16.mxu0 0
      %570 = vmatpush2.bf16.msra.mxu0 0
      %571 = vmatprep.subr.bf16.mxu0 0
      %572 = vmatpush2.bf16.msra.mxu0 0
      %573 = vmatprep.subr.bf16.mxu0 0
      %574 = vmatpush2.bf16.msra.mxu0 0
      %575 = vmatprep.subr.bf16.mxu0 0
      %576 = vmatpush2.bf16.msra.mxu0 0
      %577 = vmatprep.subr.bf16.mxu0 0
      %578 = vmatpush2.bf16.msra.mxu0 0
      %579 = vmatprep.subr.bf16.mxu0 0
      %580 = vmatpush2.bf16.msra.mxu0 0
      %581 = vmatprep.subr.bf16.mxu0 0
      %582 = vmatpush2.bf16.msra.mxu0 0
      %583 = vmatprep.mubr.bf16.mxu0 0
      %584 = vmatmul.mubr.bf16.gmra.mxu0 %v528
      %v585 = vpop.f32.mrf.mxu0
      %v586 = vadd.f32 %v311, %v585
      %v587 = vpop.f32.mrf.mxu0
      %v588 = vpop.f32.mrf.mxu0
      %v589 = vadd.f32 %v311, %v588
      %v590 = vpop.f32.mrf.mxu0
      %591 = vmatprep.mubr.bf16.mxu0 0
      %592 = vmatmul.mubr.bf16.gmra.mxu0 %v531
      %v593 = vpop.f32.mrf.mxu0
      %v594 = vadd.f32 %v311, %v593
      %v595 = vpop.f32.mrf.mxu0
      %v596 = vpop.f32.mrf.mxu0
      %v597 = vadd.f32 %v311, %v596
      %v598 = vpop.f32.mrf.mxu0
      %599 = vmatprep.mubr.bf16.mxu0 0
      %600 = vmatmul.mubr.bf16.gmra.mxu0 %v534
      %v601 = vpop.f32.mrf.mxu0
      %v602 = vadd.f32 %v311, %v601
      %v603 = vpop.f32.mrf.mxu0
      %v604 = vpop.f32.mrf.mxu0
      %v605 = vadd.f32 %v311, %v604
      %v606 = vpop.f32.mrf.mxu0
      %607 = vmatprep.mubr.bf16.mxu0 0
      %608 = vmatmul.mubr.bf16.gmra.mxu0 %v537
      %v609 = vpop.f32.mrf.mxu0
      %v610 = vadd.f32 %v311, %v609
      %v611 = vpop.f32.mrf.mxu0
      %v612 = vpop.f32.mrf.mxu0
      %v613 = vadd.f32 %v311, %v612
      %v614 = vpop.f32.mrf.mxu0
      %615 = vmatprep.mubr.bf16.mxu0 0
      %616 = vmatmul.mubr.bf16.gmra.mxu0 %v540
      %v617 = vpop.f32.mrf.mxu0
      %v618 = vadd.f32 %v311, %v617
      %v619 = vpop.f32.mrf.mxu0
      %v620 = vpop.f32.mrf.mxu0
      %v621 = vadd.f32 %v311, %v620
      %v622 = vpop.f32.mrf.mxu0
      %623 = vmatprep.mubr.bf16.mxu0 0
      %624 = vmatmul.mubr.bf16.gmra.mxu0 %v543
      %v625 = vpop.f32.mrf.mxu0
      %v626 = vadd.f32 %v311, %v625
      %v627 = vpop.f32.mrf.mxu0
      %v628 = vpop.f32.mrf.mxu0
      %v629 = vadd.f32 %v311, %v628
      %v630 = vpop.f32.mrf.mxu0
      %631 = vmatprep.mubr.bf16.mxu0 0
      %632 = vmatmul.mubr.bf16.gmra.mxu0 %v546
      %v633 = vpop.f32.mrf.mxu0
      %v634 = vadd.f32 %v311, %v633
      %v635 = vpop.f32.mrf.mxu0
      %v636 = vpop.f32.mrf.mxu0
      %v637 = vadd.f32 %v311, %v636
      %v638 = vpop.f32.mrf.mxu0
      %639 = vmatprep.mubr.bf16.mxu0 0
      %640 = vmatmul.mubr.bf16.gmra.mxu0 %v549
      %v641 = vpop.f32.mrf.mxu0
      %v642 = vadd.f32 %v311, %v641
      %v643 = vpop.f32.mrf.mxu0
      %v644 = vpop.f32.mrf.mxu0
      %v645 = vadd.f32 %v311, %v644
      %v646 = vpop.f32.mrf.mxu0
      %647 = vdwg.mxu0
      %v648 = vmax.f32 %v586, 0.0
      %v649 = vmax.f32 %v589, 0.0
      %v650 = vmax.f32 %v594, 0.0
      %v651 = vmax.f32 %v597, 0.0
      %v652 = vmax.f32 %v602, 0.0
      %v653 = vmax.f32 %v605, 0.0
      %v654 = vmax.f32 %v610, 0.0
      %v655 = vmax.f32 %v613, 0.0
      %v656 = vmax.f32 %v618, 0.0
      %v657 = vmax.f32 %v621, 0.0
      %v658 = vmax.f32 %v626, 0.0
      %v659 = vmax.f32 %v629, 0.0
      %v660 = vmax.f32 %v634, 0.0
      %v661 = vmax.f32 %v637, 0.0
      %v662 = vmax.f32 %v642, 0.0
      %v663 = vmax.f32 %v645, 0.0
      %v664 = vpack.c.bf16 %v649, %v648
      %v665 = vpack.c.bf16 %v651, %v650
      %v666 = vpack.c.bf16 %v653, %v652
      %v667 = vpack.c.bf16 %v655, %v654
      %v668 = vpack.c.bf16 %v657, %v656
      %v669 = vpack.c.bf16 %v659, %v658
      %v670 = vpack.c.bf16 %v661, %v660
      %v671 = vpack.c.bf16 %v663, %v662
      %v676 = vunpack.c.l.b16 %v295
      %v677 = vunpack.c.l.b16 %v296
      %v678 = vunpack.c.l.b16 %v297
      %v679 = vunpack.c.l.b16 %v298
      %v680 = vpack.c.b16 %v677, %v676
      %v681 = vpack.c.b16 %v679, %v678
      %v685 = vsel %vm356, %v664, 0
      %v688 = vsel %vm356, %v665, 0
      %v691 = vsel %vm356, %v666, 0
      %v694 = vsel %vm356, %v667, 0
      %v697 = vsel %vm356, %v668, 0
      %v700 = vsel %vm356, %v669, 0
      %v703 = vsel %vm356, %v670, 0
      %v706 = vsel %vm356, %v671, 0
      %708 = vmatprep.subr.bf16.mxu0 0
      %709 = vmatpush1.bf16.msra.mxu0 0
      %710 = vmatprep.subr.bf16.mxu0 0
      %711 = vmatpush1.bf16.msra.mxu0 0
      %712 = vmatprep.subr.bf16.mxu0 0
      %713 = vmatpush1.bf16.msra.mxu0 0
      %714 = vmatprep.subr.bf16.mxu0 0
      %715 = vmatpush1.bf16.msra.mxu0 0
      %716 = vmatprep.subr.bf16.mxu0 0
      %717 = vmatpush1.bf16.msra.mxu0 0
      %718 = vmatprep.subr.bf16.mxu0 0
      %719 = vmatpush1.bf16.msra.mxu0 0
      %720 = vmatprep.subr.bf16.mxu0 0
      %721 = vmatpush1.bf16.msra.mxu0 %v681
      %722 = vmatprep.subr.bf16.mxu0 0
      %723 = vmatpush1.bf16.msra.mxu0 %v680
      %724 = vmatprep.subr.bf16.mxu0 0
      %725 = vmatpush2.bf16.msra.mxu0 0
      %726 = vmatprep.subr.bf16.mxu0 0
      %727 = vmatpush2.bf16.msra.mxu0 0
      %728 = vmatprep.subr.bf16.mxu0 0
      %729 = vmatpush2.bf16.msra.mxu0 0
      %730 = vmatprep.subr.bf16.mxu0 0
      %731 = vmatpush2.bf16.msra.mxu0 0
      %732 = vmatprep.subr.bf16.mxu0 0
      %733 = vmatpush2.bf16.msra.mxu0 0
      %734 = vmatprep.subr.bf16.mxu0 0
      %735 = vmatpush2.bf16.msra.mxu0 0
      %736 = vmatprep.subr.bf16.mxu0 0
      %737 = vmatpush2.bf16.msra.mxu0 0
      %738 = vmatprep.subr.bf16.mxu0 0
      %739 = vmatpush2.bf16.msra.mxu0 0
      %740 = vmatprep.mubr.bf16.mxu0 0
      %741 = vmatmul.mubr.bf16.gmra.mxu0 %v685
      %v742 = vpop.f32.mrf.mxu0
      %v743 = vadd.f32 %v318, %v742
      %v744 = vpop.f32.mrf.mxu0
      %v745 = vpop.f32.mrf.mxu0
      %v746 = vadd.f32 %v318, %v745
      %v747 = vpop.f32.mrf.mxu0
      %748 = vmatprep.mubr.bf16.mxu0 0
      %749 = vmatmul.mubr.bf16.gmra.mxu0 %v688
      %v750 = vpop.f32.mrf.mxu0
      %v751 = vadd.f32 %v318, %v750
      %v752 = vpop.f32.mrf.mxu0
      %v753 = vpop.f32.mrf.mxu0
      %v754 = vadd.f32 %v318, %v753
      %v755 = vpop.f32.mrf.mxu0
      %756 = vmatprep.mubr.bf16.mxu0 0
      %757 = vmatmul.mubr.bf16.gmra.mxu0 %v691
      %v758 = vpop.f32.mrf.mxu0
      %v759 = vadd.f32 %v318, %v758
      %v760 = vpop.f32.mrf.mxu0
      %v761 = vpop.f32.mrf.mxu0
      %v762 = vadd.f32 %v318, %v761
      %v763 = vpop.f32.mrf.mxu0
      %764 = vmatprep.mubr.bf16.mxu0 0
      %765 = vmatmul.mubr.bf16.gmra.mxu0 %v694
      %v766 = vpop.f32.mrf.mxu0
      %v767 = vadd.f32 %v318, %v766
      %v768 = vpop.f32.mrf.mxu0
      %v769 = vpop.f32.mrf.mxu0
      %v770 = vadd.f32 %v318, %v769
      %v771 = vpop.f32.mrf.mxu0
      %772 = vmatprep.mubr.bf16.mxu0 0
      %773 = vmatmul.mubr.bf16.gmra.mxu0 %v697
      %v774 = vpop.f32.mrf.mxu0
      %v775 = vadd.f32 %v318, %v774
      %v776 = vpop.f32.mrf.mxu0
      %v777 = vpop.f32.mrf.mxu0
      %v778 = vadd.f32 %v318, %v777
      %v779 = vpop.f32.mrf.mxu0
      %780 = vmatprep.mubr.bf16.mxu0 0
      %781 = vmatmul.mubr.bf16.gmra.mxu0 %v700
      %v782 = vpop.f32.mrf.mxu0
      %v783 = vadd.f32 %v318, %v782
      %v784 = vpop.f32.mrf.mxu0
      %v785 = vpop.f32.mrf.mxu0
      %v786 = vadd.f32 %v318, %v785
      %v787 = vpop.f32.mrf.mxu0
      %788 = vmatprep.mubr.bf16.mxu0 0
      %789 = vmatmul.mubr.bf16.gmra.mxu0 %v703
      %v790 = vpop.f32.mrf.mxu0
      %v791 = vadd.f32 %v318, %v790
      %v792 = vpop.f32.mrf.mxu0
      %v793 = vpop.f32.mrf.mxu0
      %v794 = vadd.f32 %v318, %v793
      %v795 = vpop.f32.mrf.mxu0
      %796 = vmatprep.mubr.bf16.mxu0 0
      %797 = vmatmul.mubr.bf16.gmra.mxu0 %v706
      %v798 = vpop.f32.mrf.mxu0
      %v799 = vadd.f32 %v318, %v798
      %v800 = vpop.f32.mrf.mxu0
      %v801 = vpop.f32.mrf.mxu0
      %v802 = vadd.f32 %v318, %v801
      %v803 = vpop.f32.mrf.mxu0
      %804 = vdwg.mxu0
      %v805 = vpack.c.bf16 %v746, %v743
      %v806 = vpack.c.bf16 %v754, %v751
      %v807 = vpack.c.bf16 %v762, %v759
      %v808 = vpack.c.bf16 %v770, %v767
      %v809 = vpack.c.bf16 %v778, %v775
      %v810 = vpack.c.bf16 %v786, %v783
      %v811 = vpack.c.bf16 %v794, %v791
      %v812 = vpack.c.bf16 %v802, %v799
      %v821 = vunpack.c.l.b16 %v805
      %v822 = vunpack.c.h.b16 %v805
      %v823 = vunpack.c.l.b16 %v806
      %v824 = vunpack.c.h.b16 %v806
      %v825 = vunpack.c.l.b16 %v807
      %v826 = vunpack.c.h.b16 %v807
      %v827 = vunpack.c.l.b16 %v808
      %v828 = vunpack.c.h.b16 %v808
      %v829 = vunpack.c.l.b16 %v809
      %v830 = vunpack.c.h.b16 %v809
      %v831 = vunpack.c.l.b16 %v810
      %v832 = vunpack.c.h.b16 %v810
      %v833 = vunpack.c.l.b16 %v811
      %v834 = vunpack.c.h.b16 %v811
      %v835 = vunpack.c.l.b16 %v812
      %v836 = vunpack.c.h.b16 %v812
      %v837 = vpack.c.b16 %v821, %v821
      %v838 = vpack.c.b16 %v822, %v822
      %v839 = vpack.c.b16 %v823, %v823
      %v840 = vpack.c.b16 %v824, %v824
      %v841 = vpack.c.b16 %v825, %v825
      %v842 = vpack.c.b16 %v826, %v826
      %v843 = vpack.c.b16 %v827, %v827
      %v844 = vpack.c.b16 %v828, %v828
      %v845 = vpack.c.b16 %v829, %v829
      %v846 = vpack.c.b16 %v830, %v830
      %v847 = vpack.c.b16 %v831, %v831
      %v848 = vpack.c.b16 %v832, %v832
      %v849 = vpack.c.b16 %v833, %v833
      %v850 = vpack.c.b16 %v834, %v834
      %v851 = vpack.c.b16 %v835, %v835
      %v852 = vpack.c.b16 %v836, %v836
      %869 = vst [vmem:[%s280] sm:$0xf] %v837
      %870 = vst [vmem:[%s280 + $0x4] sm:$0xf] %v838
      %871 = vst [vmem:[%s280 + $0x8] sm:$0xf] %v839
      %872 = vst [vmem:[%s280 + $0xc] sm:$0xf] %v840
      %873 = vst [vmem:[%s280 + $0x10] sm:$0xf] %v841
      %874 = vst [vmem:[%s280 + $0x14] sm:$0xf] %v842
      %875 = vst [vmem:[%s280 + $0x18] sm:$0xf] %v843
      %876 = vst [vmem:[%s280 + $0x1c] sm:$0xf] %v844
      %877 = vst [vmem:[%s280 + $0x20] sm:$0xf] %v845
      %878 = vst [vmem:[%s280 + $0x24] sm:$0xf] %v846
      %879 = vst [vmem:[%s280 + $0x28] sm:$0xf] %v847
      %880 = vst [vmem:[%s280 + $0x2c] sm:$0xf] %v848
      %881 = vst [vmem:[%s280 + $0x30] sm:$0xf] %v849
      %882 = vst [vmem:[%s280 + $0x34] sm:$0xf] %v850
      %883 = vst [vmem:[%s280 + $0x38] sm:$0xf] %v851
      %884 = vst [vmem:[%s280 + $0x3c] sm:$0xf] %v852
      %s885 = scalar_lea.vmem %s274, 128
      %v886 = vld [vmem:[%s885] sm:$0xff]
      %v887 = vld [vmem:[%s885 + $0x8] sm:$0xff]
      %v888 = vld [vmem:[%s885 + $0x10] sm:$0xff]
      %v889 = vld [vmem:[%s885 + $0x18] sm:$0xff]
      %v890 = vld [vmem:[%s885 + $0x20] sm:$0xff]
      %v891 = vld [vmem:[%s885 + $0x28] sm:$0xff]
      %v892 = vld [vmem:[%s885 + $0x30] sm:$0xff]
      %v893 = vld [vmem:[%s885 + $0x38] sm:$0xff]
      %v894 = vld [vmem:[%s885 + $0x40] sm:$0xff]
      %v895 = vld [vmem:[%s885 + $0x48] sm:$0xff]
      %v896 = vld [vmem:[%s885 + $0x50] sm:$0xff]
      %v897 = vld [vmem:[%s885 + $0x58] sm:$0xff]
      %v898 = vld [vmem:[%s885 + $0x60] sm:$0xff]
      %v899 = vld [vmem:[%s885 + $0x68] sm:$0xff]
      %v900 = vld [vmem:[%s885 + $0x70] sm:$0xff]
      %v901 = vld [vmem:[%s885 + $0x78] sm:$0xff]
      %v902 = vpack.c.bf16 %v887, %v886
      %v903 = vpack.c.bf16 %v889, %v888
      %v904 = vpack.c.bf16 %v891, %v890
      %v905 = vpack.c.bf16 %v893, %v892
      %v906 = vpack.c.bf16 %v895, %v894
      %v907 = vpack.c.bf16 %v897, %v896
      %v908 = vpack.c.bf16 %v899, %v898
      %v909 = vpack.c.bf16 %v901, %v900
      %v911 = vsel %vm356, %v902, 0
      %v914 = vsel %vm356, %v903, 0
      %v917 = vsel %vm356, %v904, 0
      %v920 = vsel %vm356, %v905, 0
      %v923 = vsel %vm356, %v906, 0
      %v926 = vsel %vm356, %v907, 0
      %v929 = vsel %vm356, %v908, 0
      %v932 = vsel %vm356, %v909, 0
      %934 = vmatprep.subr.bf16.mxu0 0
      %935 = vmatpush1.bf16.msra.mxu0 0
      %936 = vmatprep.subr.bf16.mxu0 0
      %937 = vmatpush1.bf16.msra.mxu0 0
      %938 = vmatprep.subr.bf16.mxu0 0
      %939 = vmatpush1.bf16.msra.mxu0 0
      %940 = vmatprep.subr.bf16.mxu0 0
      %941 = vmatpush1.bf16.msra.mxu0 0
      %942 = vmatprep.subr.bf16.mxu0 0
      %943 = vmatpush1.bf16.msra.mxu0 0
      %944 = vmatprep.subr.bf16.mxu0 0
      %945 = vmatpush1.bf16.msra.mxu0 0
      %946 = vmatprep.subr.bf16.mxu0 0
      %947 = vmatpush1.bf16.msra.mxu0 %v353
      %948 = vmatprep.subr.bf16.mxu0 0
      %949 = vmatpush1.bf16.msra.mxu0 %v352
      %950 = vmatprep.subr.bf16.mxu0 0
      %951 = vmatpush2.bf16.msra.mxu0 0
      %952 = vmatprep.subr.bf16.mxu0 0
      %953 = vmatpush2.bf16.msra.mxu0 0
      %954 = vmatprep.subr.bf16.mxu0 0
      %955 = vmatpush2.bf16.msra.mxu0 0
      %956 = vmatprep.subr.bf16.mxu0 0
      %957 = vmatpush2.bf16.msra.mxu0 0
      %958 = vmatprep.subr.bf16.mxu0 0
      %959 = vmatpush2.bf16.msra.mxu0 0
      %960 = vmatprep.subr.bf16.mxu0 0
      %961 = vmatpush2.bf16.msra.mxu0 0
      %962 = vmatprep.subr.bf16.mxu0 0
      %963 = vmatpush2.bf16.msra.mxu0 0
      %964 = vmatprep.subr.bf16.mxu0 0
      %965 = vmatpush2.bf16.msra.mxu0 0
      %966 = vmatprep.mubr.bf16.mxu0 0
      %967 = vmatmul.mubr.bf16.gmra.mxu0 %v911
      %v968 = vpop.f32.mrf.mxu0
      %v969 = vadd.f32 %v304, %v968
      %v970 = vpop.f32.mrf.mxu0
      %v971 = vpop.f32.mrf.mxu0
      %v972 = vadd.f32 %v304, %v971
      %v973 = vpop.f32.mrf.mxu0
      %974 = vmatprep.mubr.bf16.mxu0 0
      %975 = vmatmul.mubr.bf16.gmra.mxu0 %v914
      %v976 = vpop.f32.mrf.mxu0
      %v977 = vadd.f32 %v304, %v976
      %v978 = vpop.f32.mrf.mxu0
      %v979 = vpop.f32.mrf.mxu0
      %v980 = vadd.f32 %v304, %v979
      %v981 = vpop.f32.mrf.mxu0
      %982 = vmatprep.mubr.bf16.mxu0 0
      %983 = vmatmul.mubr.bf16.gmra.mxu0 %v917
      %v984 = vpop.f32.mrf.mxu0
      %v985 = vadd.f32 %v304, %v984
      %v986 = vpop.f32.mrf.mxu0
      %v987 = vpop.f32.mrf.mxu0
      %v988 = vadd.f32 %v304, %v987
      %v989 = vpop.f32.mrf.mxu0
      %990 = vmatprep.mubr.bf16.mxu0 0
      %991 = vmatmul.mubr.bf16.gmra.mxu0 %v920
      %v992 = vpop.f32.mrf.mxu0
      %v993 = vadd.f32 %v304, %v992
      %v994 = vpop.f32.mrf.mxu0
      %v995 = vpop.f32.mrf.mxu0
      %v996 = vadd.f32 %v304, %v995
      %v997 = vpop.f32.mrf.mxu0
      %998 = vmatprep.mubr.bf16.mxu0 0
      %999 = vmatmul.mubr.bf16.gmra.mxu0 %v923
      %v1000 = vpop.f32.mrf.mxu0
      %v1001 = vadd.f32 %v304, %v1000
      %v1002 = vpop.f32.mrf.mxu0
      %v1003 = vpop.f32.mrf.mxu0
      %v1004 = vadd.f32 %v304, %v1003
      %v1005 = vpop.f32.mrf.mxu0
      %1006 = vmatprep.mubr.bf16.mxu0 0
      %1007 = vmatmul.mubr.bf16.gmra.mxu0 %v926
      %v1008 = vpop.f32.mrf.mxu0
      %v1009 = vadd.f32 %v304, %v1008
      %v1010 = vpop.f32.mrf.mxu0
      %v1011 = vpop.f32.mrf.mxu0
      %v1012 = vadd.f32 %v304, %v1011
      %v1013 = vpop.f32.mrf.mxu0
      %1014 = vmatprep.mubr.bf16.mxu0 0
      %1015 = vmatmul.mubr.bf16.gmra.mxu0 %v929
      %v1016 = vpop.f32.mrf.mxu0
      %v1017 = vadd.f32 %v304, %v1016
      %v1018 = vpop.f32.mrf.mxu0
      %v1019 = vpop.f32.mrf.mxu0
      %v1020 = vadd.f32 %v304, %v1019
      %v1021 = vpop.f32.mrf.mxu0
      %1022 = vmatprep.mubr.bf16.mxu0 0
      %1023 = vmatmul.mubr.bf16.gmra.mxu0 %v932
      %v1024 = vpop.f32.mrf.mxu0
      %v1025 = vadd.f32 %v304, %v1024
      %v1026 = vpop.f32.mrf.mxu0
      %v1027 = vpop.f32.mrf.mxu0
      %v1028 = vadd.f32 %v304, %v1027
      %v1029 = vpop.f32.mrf.mxu0
      %1030 = vdwg.mxu0
      %v1031 = vmax.f32 %v969, 0.0
      %v1032 = vmax.f32 %v972, 0.0
      %v1033 = vmax.f32 %v977, 0.0
      %v1034 = vmax.f32 %v980, 0.0
      %v1035 = vmax.f32 %v985, 0.0
      %v1036 = vmax.f32 %v988, 0.0
      %v1037 = vmax.f32 %v993, 0.0
      %v1038 = vmax.f32 %v996, 0.0
      %v1039 = vmax.f32 %v1001, 0.0
      %v1040 = vmax.f32 %v1004, 0.0
      %v1041 = vmax.f32 %v1009, 0.0
      %v1042 = vmax.f32 %v1012, 0.0
      %v1043 = vmax.f32 %v1017, 0.0
      %v1044 = vmax.f32 %v1020, 0.0
      %v1045 = vmax.f32 %v1025, 0.0
      %v1046 = vmax.f32 %v1028, 0.0
      %v1047 = vpack.c.bf16 %v1032, %v1031
      %v1048 = vpack.c.bf16 %v1034, %v1033
      %v1049 = vpack.c.bf16 %v1036, %v1035
      %v1050 = vpack.c.bf16 %v1038, %v1037
      %v1051 = vpack.c.bf16 %v1040, %v1039
      %v1052 = vpack.c.bf16 %v1042, %v1041
      %v1053 = vpack.c.bf16 %v1044, %v1043
      %v1054 = vpack.c.bf16 %v1046, %v1045
      %v1056 = vsel %vm526, %v1047, 0
      %v1059 = vsel %vm526, %v1048, 0
      %v1062 = vsel %vm526, %v1049, 0
      %v1065 = vsel %vm526, %v1050, 0
      %v1068 = vsel %vm526, %v1051, 0
      %v1071 = vsel %vm526, %v1052, 0
      %v1074 = vsel %vm526, %v1053, 0
      %v1077 = vsel %vm526, %v1054, 0
      %1079 = vmatprep.subr.bf16.mxu0 0
      %1080 = vmatpush1.bf16.msra.mxu0 0
      %1081 = vmatprep.subr.bf16.mxu0 0
      %1082 = vmatpush1.bf16.msra.mxu0 0
      %1083 = vmatprep.subr.bf16.mxu0 0
      %1084 = vmatpush1.bf16.msra.mxu0 0
      %1085 = vmatprep.subr.bf16.mxu0 0
      %1086 = vmatpush1.bf16.msra.mxu0 0
      %1087 = vmatprep.subr.bf16.mxu0 0
      %1088 = vmatpush1.bf16.msra.mxu0 %v521
      %1089 = vmatprep.subr.bf16.mxu0 0
      %1090 = vmatpush1.bf16.msra.mxu0 %v520
      %1091 = vmatprep.subr.bf16.mxu0 0
      %1092 = vmatpush1.bf16.msra.mxu0 %v519
      %1093 = vmatprep.subr.bf16.mxu0 0
      %1094 = vmatpush1.bf16.msra.mxu0 %v518
      %1095 = vmatprep.subr.bf16.mxu0 0
      %1096 = vmatpush2.bf16.msra.mxu0 0
      %1097 = vmatprep.subr.bf16.mxu0 0
      %1098 = vmatpush2.bf16.msra.mxu0 0
      %1099 = vmatprep.subr.bf16.mxu0 0
      %1100 = vmatpush2.bf16.msra.mxu0 0
      %1101 = vmatprep.subr.bf16.mxu0 0
      %1102 = vmatpush2.bf16.msra.mxu0 0
      %1103 = vmatprep.subr.bf16.mxu0 0
      %1104 = vmatpush2.bf16.msra.mxu0 0
      %1105 = vmatprep.subr.bf16.mxu0 0
      %1106 = vmatpush2.bf16.msra.mxu0 0
      %1107 = vmatprep.subr.bf16.mxu0 0
      %1108 = vmatpush2.bf16.msra.mxu0 0
      %1109 = vmatprep.subr.bf16.mxu0 0
      %1110 = vmatpush2.bf16.msra.mxu0 0
      %1111 = vmatprep.mubr.bf16.mxu0 0
      %1112 = vmatmul.mubr.bf16.gmra.mxu0 %v1056
      %v1113 = vpop.f32.mrf.mxu0
      %v1114 = vadd.f32 %v311, %v1113
      %v1115 = vpop.f32.mrf.mxu0
      %v1116 = vpop.f32.mrf.mxu0
      %v1117 = vadd.f32 %v311, %v1116
      %v1118 = vpop.f32.mrf.mxu0
      %1119 = vmatprep.mubr.bf16.mxu0 0
      %1120 = vmatmul.mubr.bf16.gmra.mxu0 %v1059
      %v1121 = vpop.f32.mrf.mxu0
      %v1122 = vadd.f32 %v311, %v1121
      %v1123 = vpop.f32.mrf.mxu0
      %v1124 = vpop.f32.mrf.mxu0
      %v1125 = vadd.f32 %v311, %v1124
      %v1126 = vpop.f32.mrf.mxu0
      %1127 = vmatprep.mubr.bf16.mxu0 0
      %1128 = vmatmul.mubr.bf16.gmra.mxu0 %v1062
      %v1129 = vpop.f32.mrf.mxu0
      %v1130 = vadd.f32 %v311, %v1129
      %v1131 = vpop.f32.mrf.mxu0
      %v1132 = vpop.f32.mrf.mxu0
      %v1133 = vadd.f32 %v311, %v1132
      %v1134 = vpop.f32.mrf.mxu0
      %1135 = vmatprep.mubr.bf16.mxu0 0
      %1136 = vmatmul.mubr.bf16.gmra.mxu0 %v1065
      %v1137 = vpop.f32.mrf.mxu0
      %v1138 = vadd.f32 %v311, %v1137
      %v1139 = vpop.f32.mrf.mxu0
      %v1140 = vpop.f32.mrf.mxu0
      %v1141 = vadd.f32 %v311, %v1140
      %v1142 = vpop.f32.mrf.mxu0
      %1143 = vmatprep.mubr.bf16.mxu0 0
      %1144 = vmatmul.mubr.bf16.gmra.mxu0 %v1068
      %v1145 = vpop.f32.mrf.mxu0
      %v1146 = vadd.f32 %v311, %v1145
      %v1147 = vpop.f32.mrf.mxu0
      %v1148 = vpop.f32.mrf.mxu0
      %v1149 = vadd.f32 %v311, %v1148
      %v1150 = vpop.f32.mrf.mxu0
      %1151 = vmatprep.mubr.bf16.mxu0 0
      %1152 = vmatmul.mubr.bf16.gmra.mxu0 %v1071
      %v1153 = vpop.f32.mrf.mxu0
      %v1154 = vadd.f32 %v311, %v1153
      %v1155 = vpop.f32.mrf.mxu0
      %v1156 = vpop.f32.mrf.mxu0
      %v1157 = vadd.f32 %v311, %v1156
      %v1158 = vpop.f32.mrf.mxu0
      %1159 = vmatprep.mubr.bf16.mxu0 0
      %1160 = vmatmul.mubr.bf16.gmra.mxu0 %v1074
      %v1161 = vpop.f32.mrf.mxu0
      %v1162 = vadd.f32 %v311, %v1161
      %v1163 = vpop.f32.mrf.mxu0
      %v1164 = vpop.f32.mrf.mxu0
      %v1165 = vadd.f32 %v311, %v1164
      %v1166 = vpop.f32.mrf.mxu0
      %1167 = vmatprep.mubr.bf16.mxu0 0
      %1168 = vmatmul.mubr.bf16.gmra.mxu0 %v1077
      %v1169 = vpop.f32.mrf.mxu0
      %v1170 = vadd.f32 %v311, %v1169
      %v1171 = vpop.f32.mrf.mxu0
      %v1172 = vpop.f32.mrf.mxu0
      %v1173 = vadd.f32 %v311, %v1172
      %v1174 = vpop.f32.mrf.mxu0
      %1175 = vdwg.mxu0
      %v1176 = vmax.f32 %v1114, 0.0
      %v1177 = vmax.f32 %v1117, 0.0
      %v1178 = vmax.f32 %v1122, 0.0
      %v1179 = vmax.f32 %v1125, 0.0
      %v1180 = vmax.f32 %v1130, 0.0
      %v1181 = vmax.f32 %v1133, 0.0
      %v1182 = vmax.f32 %v1138, 0.0
      %v1183 = vmax.f32 %v1141, 0.0
      %v1184 = vmax.f32 %v1146, 0.0
      %v1185 = vmax.f32 %v1149, 0.0
      %v1186 = vmax.f32 %v1154, 0.0
      %v1187 = vmax.f32 %v1157, 0.0
      %v1188 = vmax.f32 %v1162, 0.0
      %v1189 = vmax.f32 %v1165, 0.0
      %v1190 = vmax.f32 %v1170, 0.0
      %v1191 = vmax.f32 %v1173, 0.0
      %v1192 = vpack.c.bf16 %v1177, %v1176
      %v1193 = vpack.c.bf16 %v1179, %v1178
      %v1194 = vpack.c.bf16 %v1181, %v1180
      %v1195 = vpack.c.bf16 %v1183, %v1182
      %v1196 = vpack.c.bf16 %v1185, %v1184
      %v1197 = vpack.c.bf16 %v1187, %v1186
      %v1198 = vpack.c.bf16 %v1189, %v1188
      %v1199 = vpack.c.bf16 %v1191, %v1190
      %v1201 = vsel %vm356, %v1192, 0
      %v1204 = vsel %vm356, %v1193, 0
      %v1207 = vsel %vm356, %v1194, 0
      %v1210 = vsel %vm356, %v1195, 0
      %v1213 = vsel %vm356, %v1196, 0
      %v1216 = vsel %vm356, %v1197, 0
      %v1219 = vsel %vm356, %v1198, 0
      %v1222 = vsel %vm356, %v1199, 0
      %1224 = vmatprep.subr.bf16.mxu0 0
      %1225 = vmatpush1.bf16.msra.mxu0 0
      %1226 = vmatprep.subr.bf16.mxu0 0
      %1227 = vmatpush1.bf16.msra.mxu0 0
      %1228 = vmatprep.subr.bf16.mxu0 0
      %1229 = vmatpush1.bf16.msra.mxu0 0
      %1230 = vmatprep.subr.bf16.mxu0 0
      %1231 = vmatpush1.bf16.msra.mxu0 0
      %1232 = vmatprep.subr.bf16.mxu0 0
      %1233 = vmatpush1.bf16.msra.mxu0 0
      %1234 = vmatprep.subr.bf16.mxu0 0
      %1235 = vmatpush1.bf16.msra.mxu0 0
      %1236 = vmatprep.subr.bf16.mxu0 0
      %1237 = vmatpush1.bf16.msra.mxu0 %v681
      %1238 = vmatprep.subr.bf16.mxu0 0
      %1239 = vmatpush1.bf16.msra.mxu0 %v680
      %1240 = vmatprep.subr.bf16.mxu0 0
      %1241 = vmatpush2.bf16.msra.mxu0 0
      %1242 = vmatprep.subr.bf16.mxu0 0
      %1243 = vmatpush2.bf16.msra.mxu0 0
      %1244 = vmatprep.subr.bf16.mxu0 0
      %1245 = vmatpush2.bf16.msra.mxu0 0
      %1246 = vmatprep.subr.bf16.mxu0 0
      %1247 = vmatpush2.bf16.msra.mxu0 0
      %1248 = vmatprep.subr.bf16.mxu0 0
      %1249 = vmatpush2.bf16.msra.mxu0 0
      %1250 = vmatprep.subr.bf16.mxu0 0
      %1251 = vmatpush2.bf16.msra.mxu0 0
      %1252 = vmatprep.subr.bf16.mxu0 0
      %1253 = vmatpush2.bf16.msra.mxu0 0
      %1254 = vmatprep.subr.bf16.mxu0 0
      %1255 = vmatpush2.bf16.msra.mxu0 0
      %1256 = vmatprep.mubr.bf16.mxu0 0
      %1257 = vmatmul.mubr.bf16.gmra.mxu0 %v1201
      %v1258 = vpop.f32.mrf.mxu0
      %v1259 = vadd.f32 %v318, %v1258
      %v1260 = vpop.f32.mrf.mxu0
      %v1261 = vpop.f32.mrf.mxu0
      %v1262 = vadd.f32 %v318, %v1261
      %v1263 = vpop.f32.mrf.mxu0
      %1264 = vmatprep.mubr.bf16.mxu0 0
      %1265 = vmatmul.mubr.bf16.gmra.mxu0 %v1204
      %v1266 = vpop.f32.mrf.mxu0
      %v1267 = vadd.f32 %v318, %v1266
      %v1268 = vpop.f32.mrf.mxu0
      %v1269 = vpop.f32.mrf.mxu0
      %v1270 = vadd.f32 %v318, %v1269
      %v1271 = vpop.f32.mrf.mxu0
      %1272 = vmatprep.mubr.bf16.mxu0 0
      %1273 = vmatmul.mubr.bf16.gmra.mxu0 %v1207
      %v1274 = vpop.f32.mrf.mxu0
      %v1275 = vadd.f32 %v318, %v1274
      %v1276 = vpop.f32.mrf.mxu0
      %v1277 = vpop.f32.mrf.mxu0
      %v1278 = vadd.f32 %v318, %v1277
      %v1279 = vpop.f32.mrf.mxu0
      %1280 = vmatprep.mubr.bf16.mxu0 0
      %1281 = vmatmul.mubr.bf16.gmra.mxu0 %v1210
      %v1282 = vpop.f32.mrf.mxu0
      %v1283 = vadd.f32 %v318, %v1282
      %v1284 = vpop.f32.mrf.mxu0
      %v1285 = vpop.f32.mrf.mxu0
      %v1286 = vadd.f32 %v318, %v1285
      %v1287 = vpop.f32.mrf.mxu0
      %1288 = vmatprep.mubr.bf16.mxu0 0
      %1289 = vmatmul.mubr.bf16.gmra.mxu0 %v1213
      %v1290 = vpop.f32.mrf.mxu0
      %v1291 = vadd.f32 %v318, %v1290
      %v1292 = vpop.f32.mrf.mxu0
      %v1293 = vpop.f32.mrf.mxu0
      %v1294 = vadd.f32 %v318, %v1293
      %v1295 = vpop.f32.mrf.mxu0
      %1296 = vmatprep.mubr.bf16.mxu0 0
      %1297 = vmatmul.mubr.bf16.gmra.mxu0 %v1216
      %v1298 = vpop.f32.mrf.mxu0
      %v1299 = vadd.f32 %v318, %v1298
      %v1300 = vpop.f32.mrf.mxu0
      %v1301 = vpop.f32.mrf.mxu0
      %v1302 = vadd.f32 %v318, %v1301
      %v1303 = vpop.f32.mrf.mxu0
      %1304 = vmatprep.mubr.bf16.mxu0 0
      %1305 = vmatmul.mubr.bf16.gmra.mxu0 %v1219
      %v1306 = vpop.f32.mrf.mxu0
      %v1307 = vadd.f32 %v318, %v1306
      %v1308 = vpop.f32.mrf.mxu0
      %v1309 = vpop.f32.mrf.mxu0
      %v1310 = vadd.f32 %v318, %v1309
      %v1311 = vpop.f32.mrf.mxu0
      %1312 = vmatprep.mubr.bf16.mxu0 0
      %1313 = vmatmul.mubr.bf16.gmra.mxu0 %v1222
      %v1314 = vpop.f32.mrf.mxu0
      %v1315 = vadd.f32 %v318, %v1314
      %v1316 = vpop.f32.mrf.mxu0
      %v1317 = vpop.f32.mrf.mxu0
      %v1318 = vadd.f32 %v318, %v1317
      %v1319 = vpop.f32.mrf.mxu0
      %1320 = vdwg.mxu0
      %v1321 = vpack.c.bf16 %v1262, %v1259
      %v1322 = vpack.c.bf16 %v1270, %v1267
      %v1323 = vpack.c.bf16 %v1278, %v1275
      %v1324 = vpack.c.bf16 %v1286, %v1283
      %v1325 = vpack.c.bf16 %v1294, %v1291
      %v1326 = vpack.c.bf16 %v1302, %v1299
      %v1327 = vpack.c.bf16 %v1310, %v1307
      %v1328 = vpack.c.bf16 %v1318, %v1315
      %v1337 = vunpack.c.l.b16 %v1321
      %v1338 = vunpack.c.h.b16 %v1321
      %v1339 = vunpack.c.l.b16 %v1322
      %v1340 = vunpack.c.h.b16 %v1322
      %v1341 = vunpack.c.l.b16 %v1323
      %v1342 = vunpack.c.h.b16 %v1323
      %v1343 = vunpack.c.l.b16 %v1324
      %v1344 = vunpack.c.h.b16 %v1324
      %v1345 = vunpack.c.l.b16 %v1325
      %v1346 = vunpack.c.h.b16 %v1325
      %v1347 = vunpack.c.l.b16 %v1326
      %v1348 = vunpack.c.h.b16 %v1326
      %v1349 = vunpack.c.l.b16 %v1327
      %v1350 = vunpack.c.h.b16 %v1327
      %v1351 = vunpack.c.l.b16 %v1328
      %v1352 = vunpack.c.h.b16 %v1328
      %v1353 = vpack.c.b16 %v1337, %v1337
      %v1354 = vpack.c.b16 %v1338, %v1338
      %v1355 = vpack.c.b16 %v1339, %v1339
      %v1356 = vpack.c.b16 %v1340, %v1340
      %v1357 = vpack.c.b16 %v1341, %v1341
      %v1358 = vpack.c.b16 %v1342, %v1342
      %v1359 = vpack.c.b16 %v1343, %v1343
      %v1360 = vpack.c.b16 %v1344, %v1344
      %v1361 = vpack.c.b16 %v1345, %v1345
      %v1362 = vpack.c.b16 %v1346, %v1346
      %v1363 = vpack.c.b16 %v1347, %v1347
      %v1364 = vpack.c.b16 %v1348, %v1348
      %v1365 = vpack.c.b16 %v1349, %v1349
      %v1366 = vpack.c.b16 %v1350, %v1350
      %v1367 = vpack.c.b16 %v1351, %v1351
      %v1368 = vpack.c.b16 %v1352, %v1352
      %s1385 = scalar_lea.vmem %s280, 64
      %1386 = vst [vmem:[%s1385] sm:$0xf] %v1353
      %1387 = vst [vmem:[%s1385 + $0x4] sm:$0xf] %v1354
      %1388 = vst [vmem:[%s1385 + $0x8] sm:$0xf] %v1355
      %1389 = vst [vmem:[%s1385 + $0xc] sm:$0xf] %v1356
      %1390 = vst [vmem:[%s1385 + $0x10] sm:$0xf] %v1357
      %1391 = vst [vmem:[%s1385 + $0x14] sm:$0xf] %v1358
      %1392 = vst [vmem:[%s1385 + $0x18] sm:$0xf] %v1359
      %1393 = vst [vmem:[%s1385 + $0x1c] sm:$0xf] %v1360
      %1394 = vst [vmem:[%s1385 + $0x20] sm:$0xf] %v1361
      %1395 = vst [vmem:[%s1385 + $0x24] sm:$0xf] %v1362
      %1396 = vst [vmem:[%s1385 + $0x28] sm:$0xf] %v1363
      %1397 = vst [vmem:[%s1385 + $0x2c] sm:$0xf] %v1364
      %1398 = vst [vmem:[%s1385 + $0x30] sm:$0xf] %v1365
      %1399 = vst [vmem:[%s1385 + $0x34] sm:$0xf] %v1366
      %1400 = vst [vmem:[%s1385 + $0x38] sm:$0xf] %v1367
      %1401 = vst [vmem:[%s1385 + $0x3c] sm:$0xf] %v1368
      %s1402 = smul.u32 32, %s18
      %p1403 = scmp.lt.s32.totalorder %s1402, 63
      %s1404 = scalar_select %p1403, %s1402, 63
      %s1405 = smul.addr %s1404, 4
      %s1406 = scalar_lea.vmem %s7, %s1405
      // Predicated region
      $region49: #{ffn_forward.1} parent=47 // pred_check
        %p1407 = pneg %p188
      $region50: #{ffn_forward.1} parent=47 // pred_check_branch
        %1409 = sbr.rel (%p1407) target = $region52
      $region51: #{ffn_forward.1} parent=47 // pred_region
        %s1410 = smul.u32 32, %s18
      $region52: #{ffn_forward.1} parent=47 // pred_fallthru
        _
    $region48: #{ffn_forward.1} parent=5 // pred_fallthru
      _
    %p1411 = scmp.le.s32.totalorder 2, %s13
    // Predicated region
    $region53: #{ffn_forward.1} parent=5 // pred_check
      %p1412 = pneg %p1411
    $region54: #{ffn_forward.1} parent=5 // pred_check_branch
      %1414 = sbr.rel (%p1412) target = $region56
    $region55: #{ffn_forward.1} parent=5 // pred_region
      %s1415 = ssub.s32 %s13, 2
      // Predicated region
      $region57: #{ffn_forward.1} parent=55 // pred_check
        %p1416 = pneg %p194
      $region58: #{ffn_forward.1} parent=55 // pred_check_branch
        %1418 = sbr.rel (%p1416) target = $region60
      $region59: #{ffn_forward.1} parent=55 // pred_region
        %s1419 = smul.u32 32, %s19
        %p1420 = scmp.lt.s32.totalorder %s1419, 63
        %s1421 = scalar_select %p1420, %s1419, 63
        %s1422 = smul.addr %s1421, 4
        %s1423 = scalar_lea.vmem %s7, %s1422
      $region60: #{ffn_forward.1} parent=55 // pred_fallthru
        _
    $region56: #{ffn_forward.1} parent=5 // pred_fallthru
      _
  $region6: #{ffn_forward.1} parent=0 // loop_footer
    %s17 = sadd.s32 1, %s13
  $region7: #{ffn_forward.1} parent=0 // loop_footer_branch
    %12 = sbr.rel target = $region3
  $region8: #{ffn_forward.1} parent=0 // loop_exit
    _

</llo_original>
